<compile_context>
chip_gen: v7x
topology: tpu7x:2x2x1
jax: 0.10.0
libtpu: 0.0.40
codegen_flags: <defaults>
</compile_context>

<pallas_src>
import jax
import jax.numpy as jnp
from jax.experimental import pallas as pl
from jax.experimental.pallas import tpu as pltpu

_MIB = 1024 * 1024

# Below this many output bytes a plain XLA slice wins outright (and can fuse
# into the consumer, which beats any materialized copy).
_MIN_PALLAS_OUT_BYTES = 2 * _MIB


def _copy_kernel(x_ref, o_ref):
    # Both refs are (row_tile, lane_tile) VMEM tiles at identical block
    # offsets.  Pure copy: Pallas clips ragged last tiles at the array bounds,
    # so the chomped tail columns are never written to the output.
    o_ref[...] = x_ref[...]


def _sublane_multiple(dtype) -> int:
    # f32 -> 8, bf16/f16 -> 16, int8/fp8 -> 32 (packed-sublane granularity).
    itemsize = jnp.dtype(dtype).itemsize
    return max(8, 32 // max(itemsize, 1))


def _round_up(x: int, m: int) -> int:
    return ((x + m - 1) // m) * m


def _round_down(x: int, m: int) -> int:
    return max((x // m) * m, m)


def _vmem_budgets():
    """Return (per_buffer_budget_bytes, vmem_limit_bytes), generation-gated."""
    cap = 64 * _MIB  # conservative fallback: assume v7x-class VMEM
    try:
        info = pltpu.get_tpu_info()
        c = getattr(info, "vmem_capacity_bytes", None)
        if c:
            cap = int(c)
    except Exception:
        pass
    if cap >= 100 * _MIB:
        # v5e / v6e: 128 MiB physical VMEM.  8 MiB buffers, 4 live buffers
        # (in + out, double-buffered) = 32 MiB, well under a 64 MiB limit.
        return 8 * _MIB, 64 * _MIB
    # v7x: 64 MiB physical / 32 MiB scoped.  Cap total live pipeline VMEM at
    # ~16 MiB (4 x 4 MiB) and leave headroom for Mosaic internal scratch.
    return 4 * _MIB, 32 * _MIB


def _pick_tiles(rows: int, l_out: int, itemsize: int,
                per_buffer_bytes: int, row_mult: int):
    """Byte-budgeted tile selection; lane axis grows first."""
    budget_elems = max(per_buffer_bytes // itemsize, row_mult * 128)
    rows_pad = _round_up(rows, row_mult)
    l_out_pad = _round_up(l_out, 128)

    # Lane axis first: longest contiguous DMA runs, fewest ragged tail tiles.
    lane_cap = _round_down(budget_elems // row_mult, 128)
    lane_tile = min(l_out_pad, lane_cap)

    # Then widen the row axis to use the rest of the budget.
    row_cap = _round_down(budget_elems // lane_tile, row_mult)
    row_tile = min(rows_pad, row_cap)

    # Keep >= 2 grid steps when possible so v7x's two TensorCores both get
    # work and the pipeline has something to overlap.  Split the row axis
    # (preserves lane contiguity per DMA descriptor).
    if (pl.cdiv(rows_pad, row_tile) <= 1) and (pl.cdiv(l_out_pad, lane_tile) <= 1):
        if rows_pad >= 2 * row_mult:
            row_tile = _round_up(rows_pad // 2, row_mult)
        elif l_out_pad >= 2 * 128:
            lane_tile = _round_up(l_out_pad // 2, 128)

    return row_tile, lane_tile


def chomp1d(x: jax.Array, chomp_size: int, *, force_pallas: bool = False) -> jax.Array:
    """Pallas implementation of Chomp1d.forward: x[:, :, :-chomp_size]."""
    assert chomp_size > 0, "chomp_size must be positive"
    n, c, l = x.shape
    l_out = l - chomp_size
    assert l_out > 0, "chomp_size must be smaller than the length axis"

    itemsize = jnp.dtype(x.dtype).itemsize
    rows = n * c

    # Small-input fast path: let XLA do (and ideally fuse) the slice.
    if not force_pallas and rows * l_out * itemsize < _MIN_PALLAS_OUT_BYTES:
        return x[:, :, :l_out]

    # Collapse batch x channels into one sublane-dense row axis
    # (free reshape for contiguous NCL layout).
    x2 = x.reshape(rows, l)

    row_mult = _sublane_multiple(x.dtype)
    per_buffer_bytes, vmem_limit_bytes = _vmem_budgets()
    row_tile, lane_tile = _pick_tiles(rows, l_out, itemsize,
                                      per_buffer_bytes, row_mult)

    grid = (pl.cdiv(rows, row_tile), pl.cdiv(l_out, lane_tile))
    block = (row_tile, lane_tile)
    index_map = lambda r, li: (r, li)  # identical map for input and output

    out2 = pl.pallas_call(
        _copy_kernel,
        out_shape=jax.ShapeDtypeStruct((rows, l_out), x.dtype),
        grid_spec=pltpu.PrefetchScalarGridSpec(
            num_scalar_prefetch=0,
            grid=grid,
            in_specs=[pl.BlockSpec(block, index_map)],
            out_specs=pl.BlockSpec(block, index_map),
        ),
        compiler_params=pltpu.CompilerParams(
            dimension_semantics=("parallel", "parallel"),
            vmem_limit_bytes=vmem_limit_bytes,
        ),
        cost_estimate=pl.CostEstimate(
            flops=0,
            transcendentals=0,
            bytes_accessed=2 * rows * l_out * itemsize,
        ),
    )(x2)

    return out2.reshape(n, c, l_out)


if __name__ == "__main__":
    key = jax.random.PRNGKey(0)
    k1, k2, k3 = jax.random.split(key, 3)

    # 1) Canonical small shape from the module spec: (batch, channels, seq_len).
    batch, channels, seq_len, chomp = 2, 4, 16, 3
    x_small = jax.random.normal(k1, (batch, channels, seq_len), dtype=jnp.float32)

    # Force the Pallas path to exercise the kernel on tiny / ragged tiles.
    y_small = jax.block_until_ready(chomp1d(x_small, chomp, force_pallas=True))
    ref_small = x_small[:, :, :-chomp]
    assert y_small.shape == (batch, channels, seq_len - chomp)
    assert jnp.array_equal(y_small, ref_small)

    # Default path (XLA slice fallback for tiny inputs) must agree.
    y_small_fast = jax.block_until_ready(chomp1d(x_small, chomp))
    assert jnp.array_equal(y_small_fast, ref_small)

    # 2) Shape that hits the tiled Pallas path naturally, with ragged tiles
    #    (rows=320, l_out=2489) and a grid that stays split across cores.
    n2, c2, l2, chomp2 = 4, 80, 2500, 11
    x_big = jax.random.normal(k2, (n2, c2, l2), dtype=jnp.float32)
    y_big = jax.block_until_ready(chomp1d(x_big, chomp2))
    ref_big = x_big[:, :, :-chomp2]
    assert y_big.shape == (n2, c2, l2 - chomp2)
    assert jnp.array_equal(y_big, ref_big)

    # 3) bf16 to exercise the dtype-aware (byte-budgeted) tile selection and
    #    the 16-row sublane packing granularity.
    n3, c3, l3, chomp3 = 2, 96, 4096, 7
    x_bf16 = jax.random.normal(k3, (n3, c3, l3), dtype=jnp.bfloat16)
    y_bf16 = jax.block_until_ready(chomp1d(x_bf16, chomp3, force_pallas=True))
    ref_bf16 = x_bf16[:, :, :-chomp3]
    assert y_bf16.shape == (n3, c3, l3 - chomp3)
    assert jnp.array_equal(y_bf16, ref_bf16)

    print("KERNEL_OK")
</pallas_src>

<mosaic_0001>
module attributes {stable_mosaic.version = 11 : i64} {
  func.func @_copy_kernel(%arg0: i32, %arg1: i32, %arg2: memref<8x128xf32, #tpu.memory_space<vmem>>, %arg3: memref<8x128xf32, #tpu.memory_space<vmem>>) attributes {dimension_semantics = [#tpu.dimension_semantics<parallel>, #tpu.dimension_semantics<parallel>], iteration_bounds = array<i64: 1, 1>, scalar_prefetch = 0 : i64, scratch_operands = 0 : i64, tpu.core_type = #tpu.core_type<tc>, window_params = [{transform_indices = @transform_0, window_bounds = array<i64: 8, 128>}, {transform_indices = @transform_1, window_bounds = array<i64: 8, 128>}]} {
    %c0 = arith.constant 0 : index
    %c0_0 = arith.constant 0 : index
    %0 = vector.load %arg2[%c0, %c0_0] : memref<8x128xf32, #tpu.memory_space<vmem>>, vector<8x128xf32>
    %c0_1 = arith.constant 0 : index
    %c0_2 = arith.constant 0 : index
    %1 = vector.load %arg3[%c0_1, %c0_2] : memref<8x128xf32, #tpu.memory_space<vmem>>, vector<8x128xf32>
    tpu.vector_store %arg3[%c0_1, %c0_2], %0 {strides = array<i32>} : memref<8x128xf32, #tpu.memory_space<vmem>>, vector<8x128xf32>,
    return
  }
  func.func @transform_0(%arg0: i32, %arg1: i32) -> (i32, i32) {
    %c0_i32 = arith.constant 0 : i32
    return %arg0, %arg1 : i32, i32
  }
  func.func @transform_1(%arg0: i32, %arg1: i32) -> (i32, i32) {
    %c0_i32 = arith.constant 0 : i32
    return %arg0, %arg1 : i32, i32
  }
}

</mosaic_0001>

<llo_original>
// kernel: tpu_custom_call.1
$region0: #{tpu_custom_call.1}
  #allocation0 [shape = 'u32[]', space=smem, size = 0x4, offset = 0x4, fixed_abs, tag = 'smem constant byte address 0x4 - core index']
  #allocation1 [shape = 'u32[144,128]{1,0:T(1,128)}', space=vmem, size = 0x12000, scoped, tag = 'internal scratch']
  %s0 = inlined_call_operand.hbm [shape: f32[8,16], index: 0, kind: input, shape index: {}]
  %s1 = inlined_call_operand.hbm [shape: f32[8,13], index: 1, kind: output, shape index: {}]
  %s2 = sld [smem:[#allocation0]]
  $region18: #{tpu_custom_call.1} parent=0
    _
  %s4 = ssub.s32 1, %s2
  %s5 = scalar_select 0, %s4, %s2
  $region1: #{tpu_custom_call.1} parent=0
    #allocation2 [shape = 'u8[4096]{0}', space=vmem, size = 0x1000, scoped, tag = 'input window, operand 0, single buffered']
    #allocation3 [shape = 's32[1]{0}', space=sflag, size = 0x4, scoped, tag = 'scoped memory for tpu_custom_call.1']
    #allocation4 [shape = 's32[1]{0}', space=sflag, size = 0x4, scoped, tag = 'scoped memory for tpu_custom_call.1']
    #allocation5 [shape = 'u8[4096]{0}', space=vmem, size = 0x1000, scoped, tag = 'output window, operand 0, single buffered']
    %6 = vsyncpa [#allocation3], 0
    %7 = vsyncpa [#allocation4], 0
    // Predicated region
    $region2: #{tpu_custom_call.1} parent=1 // pred_check
      _
    $region3: #{tpu_custom_call.1} parent=1 // pred_check_branch
      %9 = sbr.rel (0) target = $region5
    $region4: #{tpu_custom_call.1} parent=1 // pred_region
      %s11 = ssub.s32 128, 128
      %12 = vsyncadd [#allocation3], %s11
      %s14 = sshll.u32 [#allocation2], 4
      %s15 = int_to_ptr.vmem [resolvable:$true] %s14
      %17 = dma.hbm_to_vmem [thread:$0]  %s0, 128, %s15, [#allocation3]
    $region5: #{tpu_custom_call.1} parent=1 // pred_fallthru
      _
    // Predicated region
    $region6: #{tpu_custom_call.1} parent=1 // pred_check
      _
    $region7: #{tpu_custom_call.1} parent=1 // pred_check_branch
      %19 = sbr.rel (0) target = $region9
    $region8: #{tpu_custom_call.1} parent=1 // pred_region
      %20 = dma.done [#allocation3], 128
    $region9: #{tpu_custom_call.1} parent=1 // pred_fallthru
      _
    %v21 = vld [vmem:[#allocation2] sm:$0xff]
    %22 = vst [vmem:[#allocation5] sm:$0xff] %v21
    // Predicated region
    $region10: #{tpu_custom_call.1} parent=1 // pred_check
      _
    $region11: #{tpu_custom_call.1} parent=1 // pred_check_branch
      %24 = sbr.rel (0) target = $region13
    $region12: #{tpu_custom_call.1} parent=1 // pred_region
      %s26 = ssub.s32 128, 128
      %27 = vsyncadd [#allocation4], %s26
      %s29 = sshll.u32 [#allocation5], 4
      %s30 = int_to_ptr.vmem [resolvable:$true] %s29
      %32 = dma.vmem_to_hbm [thread:$0]  %s30, 128, %s1, [#allocation4]
    $region13: #{tpu_custom_call.1} parent=1 // pred_fallthru
      _
    // Predicated region
    $region14: #{tpu_custom_call.1} parent=1 // pred_check
      _
    $region15: #{tpu_custom_call.1} parent=1 // pred_check_branch
      %34 = sbr.rel (0) target = $region17
    $region16: #{tpu_custom_call.1} parent=1 // pred_region
      %35 = dma.done [#allocation4], 128
    $region17: #{tpu_custom_call.1} parent=1 // pred_fallthru
      _
    %36 = vsyncpa [#allocation3], 1
    %37 = vsyncpa [#allocation4], 1

</llo_original>
